<compile_context>
chip_gen: v7x
topology: tpu7x:2x2x1
jax: 0.10.0
libtpu: 0.0.40
codegen_flags: <defaults>
</compile_context>

<pallas_src>
import jax
import jax.numpy as jnp
from jax import lax
from jax.experimental import pallas as pl
from jax.experimental.pallas import tpu as pltpu


def _features_embedding_kernel(idx_ref, table_ref, out_ref):
    """One grid step = one tile of N elements; all F features fused.

    idx_ref:   (n_tile, F)    int32   element-major feature labels
    table_ref: (F*Vmax, D)    float32 flattened, zero-padded tables (resident)
    out_ref:   (n_tile, D)    float32 written exactly once
    """
    n, num_feats = idx_ref.shape
    fv, _ = table_ref.shape
    vmax = fv // num_feats

    # Shift each feature's labels into its own Vmax-sized slice of the
    # flattened vocab: shifted[n, f] = idx[n, f] + f * Vmax.
    feat_offsets = lax.broadcasted_iota(jnp.int32, (n, num_feats), 1) * vmax
    shifted = idx_ref[...] + feat_offsets                      # (n, F)

    # Block-diagonal multi-hot: multi[n, c] = sum_f [shifted[n, f] == c].
    col = lax.broadcasted_iota(jnp.int32, (n, fv), 1)          # (n, F*Vmax)
    multi = jnp.zeros((n, fv), jnp.float32)
    for f in range(num_feats):  # static unroll, F is tiny (e.g. 3)
        multi = multi + (shifted[:, f:f + 1] == col).astype(jnp.float32)

    # Single fused MXU contraction == sum over features of embedding lookups.
    out_ref[...] = jnp.dot(multi, table_ref[...],
                           preferred_element_type=jnp.float32)


def features_embedding(indices_nf, tables):
    """indices_nf: (N, F) int32, tables: (F, Vmax, D) float32 -> (N, D) float32."""
    N, F = indices_nf.shape
    Ft, Vmax, D = tables.shape
    assert F == Ft
    table_flat = tables.reshape(F * Vmax, D)

    # Tile N only when it is large; keep tiles lane/sublane friendly.
    n_tile = N
    if N > 1024:
        for cand in (1024, 512, 256, 128):
            if N % cand == 0:
                n_tile = cand
                break
    grid = (N // n_tile,)

    return pl.pallas_call(
        _features_embedding_kernel,
        out_shape=jax.ShapeDtypeStruct((N, D), jnp.float32),
        grid_spec=pltpu.PrefetchScalarGridSpec(
            num_scalar_prefetch=0,
            grid=grid,
            in_specs=[
                # One tile of element-major indices per step.
                pl.BlockSpec((n_tile, F), lambda i: (i, 0)),
                # Full flattened table, same block every step => resident in VMEM.
                pl.BlockSpec((F * Vmax, D), lambda i: (0, 0)),
            ],
            out_specs=pl.BlockSpec((n_tile, D), lambda i: (i, 0)),
        ),
        compiler_params=pltpu.CompilerParams(
            dimension_semantics=("parallel",)),  # v7x: 2 TCs split the N tiles
    )(indices_nf, table_flat)


def xavier_uniform(key, shape):
    """nn.init.xavier_uniform_ for a 2D (num_embeddings, embed_dim) weight."""
    fan_in, fan_out = shape
    a = (6.0 / (fan_in + fan_out)) ** 0.5
    return jax.random.uniform(key, shape, jnp.float32, minval=-a, maxval=a)


if __name__ == "__main__":
    key = jax.random.PRNGKey(0)

    # Module configuration (mirrors __init__):
    #   feat_list with |possible_values| = [7, 11, 5], feat_padding = 5
    #   => nn.Embedding input dims = [12, 16, 10]; embed_dim = 32.
    possible_value_counts = [7, 11, 5]
    feat_padding = 5
    embed_dim = 32
    num_elements = 8                      # e.g. number of nodes in the graph

    input_dims = [c + feat_padding for c in possible_value_counts]
    vmax = max(input_dims)
    num_feats = len(input_dims)

    # Deterministic Xavier-uniform embedding tables, zero-padded to Vmax.
    keys = jax.random.split(key, num_feats + num_feats)
    tables = []
    raw_tables = []
    for i, in_dim in enumerate(input_dims):
        w = xavier_uniform(keys[i], (in_dim, embed_dim))
        raw_tables.append(w)
        tables.append(jnp.pad(w, ((0, vmax - in_dim), (0, 0))))
    tables = jnp.stack(tables, axis=0)                      # (F, Vmax, D)

    # Deterministic integer feature labels, in-range for each feature.
    idx_list = []
    for i, c in enumerate(possible_value_counts):
        idx_list.append(
            jax.random.randint(keys[num_feats + i], (num_elements,), 0, c))
    indices_nf = jnp.stack(idx_list, axis=-1).astype(jnp.int32)  # (N, F)

    out = features_embedding(indices_nf, tables)
    jax.block_until_ready(out)

    # Pure-JAX reference: sum of per-feature embedding lookups.
    ref = jnp.zeros((num_elements, embed_dim), jnp.float32)
    for f in range(num_feats):
        ref = ref + raw_tables[f][indices_nf[:, f]]

    assert out.shape == (num_elements, embed_dim)
    assert out.dtype == jnp.float32
    assert jnp.allclose(out, ref, atol=1e-5, rtol=1e-5)

    print("KERNEL_OK")
</pallas_src>

<mosaic_0001>
module attributes {stable_mosaic.version = 11 : i64} {
  func.func @_features_embedding_kernel(%arg0: i32, %arg1: memref<8x3xi32, #tpu.memory_space<vmem>>, %arg2: memref<48x32xf32, #tpu.memory_space<vmem>>, %arg3: memref<8x32xf32, #tpu.memory_space<vmem>>) attributes {dimension_semantics = [#tpu.dimension_semantics<parallel>], iteration_bounds = array<i64: 1>, scalar_prefetch = 0 : i64, scratch_operands = 0 : i64, tpu.core_type = #tpu.core_type<tc>, window_params = [{transform_indices = @transform_0, window_bounds = array<i64: 8, 3>}, {pipeline_mode = #tpu.pipeline_mode<synchronous>, transform_indices = @transform_1, window_bounds = array<i64: 48, 32>}, {transform_indices = @transform_2, window_bounds = array<i64: 8, 32>}]} {
    %0 = tpu.iota {dimensions = array<i32: 1>} : vector<8x3xi32>
    %c16_i32 = arith.constant 16 : i32
    %1 = vector.broadcast %c16_i32 : i32 to vector<8x3xi32>
    %2 = arith.muli %0, %1 : vector<8x3xi32>
    %c0 = arith.constant 0 : index
    %c0_0 = arith.constant 0 : index
    %3 = vector.load %arg1[%c0, %c0_0] : memref<8x3xi32, #tpu.memory_space<vmem>>, vector<8x3xi32>
    %4 = arith.addi %3, %2 : vector<8x3xi32>
    %5 = tpu.iota {dimensions = array<i32: 1>} : vector<8x48xi32>
    %cst = arith.constant 0.000000e+00 : f32
    %6 = vector.broadcast %cst : f32 to vector<8x48xf32>
    %7 = vector.extract_strided_slice %4 {offsets = [0, 0], sizes = [8, 1], strides = [1, 1]} : vector<8x3xi32> to vector<8x1xi32>
    %8 = vector.broadcast %7 : vector<8x1xi32> to vector<8x48xi32>
    %9 = arith.cmpi eq, %8, %5 : vector<8x48xi32>
    %10 = arith.extui %9 : vector<8x48xi1> to vector<8x48xi32>
    %11 = arith.sitofp %10 : vector<8x48xi32> to vector<8x48xf32>
    %12 = arith.addf %6, %11 : vector<8x48xf32>
    %13 = vector.extract_strided_slice %4 {offsets = [0, 1], sizes = [8, 1], strides = [1, 1]} : vector<8x3xi32> to vector<8x1xi32>
    %14 = vector.broadcast %13 : vector<8x1xi32> to vector<8x48xi32>
    %15 = arith.cmpi eq, %14, %5 : vector<8x48xi32>
    %16 = arith.extui %15 : vector<8x48xi1> to vector<8x48xi32>
    %17 = arith.sitofp %16 : vector<8x48xi32> to vector<8x48xf32>
    %18 = arith.addf %12, %17 : vector<8x48xf32>
    %19 = vector.extract_strided_slice %4 {offsets = [0, 2], sizes = [8, 1], strides = [1, 1]} : vector<8x3xi32> to vector<8x1xi32>
    %20 = vector.broadcast %19 : vector<8x1xi32> to vector<8x48xi32>
    %21 = arith.cmpi eq, %20, %5 : vector<8x48xi32>
    %22 = arith.extui %21 : vector<8x48xi1> to vector<8x48xi32>
    %23 = arith.sitofp %22 : vector<8x48xi32> to vector<8x48xf32>
    %24 = arith.addf %18, %23 : vector<8x48xf32>
    %c0_1 = arith.constant 0 : index
    %c0_2 = arith.constant 0 : index
    %25 = vector.load %arg2[%c0_1, %c0_2] : memref<48x32xf32, #tpu.memory_space<vmem>>, vector<48x32xf32>
    %cst_3 = arith.constant dense<0.000000e+00> : vector<8x32xf32>
    %26 = tpu.matmul %24, %25, %cst_3 {dimension_numbers = #tpu.dot_dimension_numbers<[1], [0], [0], [1], [0, 0, 1, 1], [], []>} : vector<8x48xf32>, vector<48x32xf32>, vector<8x32xf32> -> vector<8x32xf32>
    %c0_4 = arith.constant 0 : index
    %c0_5 = arith.constant 0 : index
    %27 = vector.load %arg3[%c0_4, %c0_5] : memref<8x32xf32, #tpu.memory_space<vmem>>, vector<8x32xf32>
    tpu.vector_store %arg3[%c0_4, %c0_5], %26 {strides = array<i32>} : memref<8x32xf32, #tpu.memory_space<vmem>>, vector<8x32xf32>,
    return
  }
  func.func @transform_0(%arg0: i32) -> (i32, i32) {
    %c0_i32 = arith.constant 0 : i32
    %c0_i32_0 = arith.constant 0 : i32
    return %arg0, %c0_i32 : i32, i32
  }
  func.func @transform_1(%arg0: i32) -> (i32, i32) {
    %c0_i32 = arith.constant 0 : i32
    %c0_i32_0 = arith.constant 0 : i32
    %c0_i32_1 = arith.constant 0 : i32
    return %c0_i32, %c0_i32_0 : i32, i32
  }
  func.func @transform_2(%arg0: i32) -> (i32, i32) {
    %c0_i32 = arith.constant 0 : i32
    %c0_i32_0 = arith.constant 0 : i32
    return %arg0, %c0_i32 : i32, i32
  }
}

</mosaic_0001>

<llo_original>
// kernel: tpu_custom_call.1
$region0: #{tpu_custom_call.1}
  #allocation0 [shape = 'u32[]', space=smem, size = 0x4, offset = 0x4, fixed_abs, tag = 'smem constant byte address 0x4 - core index']
  #allocation1 [shape = 'u32[144,128]{1,0:T(1,128)}', space=vmem, size = 0x12000, scoped, tag = 'internal scratch']
  %s0 = inlined_call_operand.vmem [shape: s32[8,3], index: 0, kind: input, shape index: {}]
  %s1 = inlined_call_operand.vmem [shape: f32[48,32], index: 1, kind: input, shape index: {}]
  %s2 = inlined_call_operand.hbm [shape: f32[8,32], index: 2, kind: output, shape index: {}]
  %s3 = sld [smem:[#allocation0]]
  $region18: #{tpu_custom_call.1} parent=0
    _
  %s5 = ssub.s32 1, %s3
  %s6 = scalar_select 0, %s5, %s3
  $region1: #{tpu_custom_call.1} parent=0
    #allocation2 [shape = 'u8[4096]{0}', space=vmem, size = 0x1000, scoped, tag = 'output window, operand 0, single buffered']
    #allocation3 [shape = 's32[1]{0}', space=sflag, size = 0x4, scoped, tag = 'scoped memory for tpu_custom_call.1']
    %7 = vsyncpa [#allocation3], 0
    // Predicated region
    $region2: #{tpu_custom_call.1} parent=1 // pred_check
      _
    $region3: #{tpu_custom_call.1} parent=1 // pred_check_branch
      %9 = sbr.rel (0) target = $region5
    $region4: #{tpu_custom_call.1} parent=1 // pred_region
      _
    $region5: #{tpu_custom_call.1} parent=1 // pred_fallthru
      _
    // Predicated region
    $region6: #{tpu_custom_call.1} parent=1 // pred_check
      _
    $region7: #{tpu_custom_call.1} parent=1 // pred_check_branch
      %11 = sbr.rel (0) target = $region9
    $region8: #{tpu_custom_call.1} parent=1 // pred_region
      _
    $region9: #{tpu_custom_call.1} parent=1 // pred_fallthru
      _
    %v12 = vlaneseq
    %v13 = vand.u32 %v12, 127
    %v14 = vmul.u32 %v13, 16
    %v15 = vld [vmem:[%s0] sm:$0xff]
    %v16 = vadd.s32 %v15, %v14
    %17 = vset.pattern.permute.xlu0 0
    %18 = vperm.xlu0 %17, %v16
    %v19 = vpop.permute.xlu0 %18
    %vm20 = vcmp.eq.s32.totalorder %v19, %v13
    %v21 = vsel %vm20, 1, 0
    %v22 = vcvt.s32.f32 %v21
    %v23 = vadd.f32 %v22, 0.0
    %24 = vset.pattern.permute.xlu0 1
    %25 = vperm.xlu0 %24, %v16
    %v26 = vpop.permute.xlu0 %25
    %vm27 = vcmp.eq.s32.totalorder %v26, %v13
    %v28 = vsel %vm27, 1, 0
    %v29 = vcvt.s32.f32 %v28
    %v30 = vadd.f32 %v23, %v29
    %31 = vset.pattern.permute.xlu0 2
    %32 = vperm.xlu0 %31, %v16
    %v33 = vpop.permute.xlu0 %32
    %vm34 = vcmp.eq.s32.totalorder %v33, %v13
    %v35 = vsel %vm34, 1, 0
    %v36 = vcvt.s32.f32 %v35
    %v37 = vadd.f32 %v30, %v36
    %v38 = vld [vmem:[%s1] sm:$0xff]
    %v39 = vld [vmem:[%s1 + $0x8] sm:$0xff]
    %v40 = vld [vmem:[%s1 + $0x10] sm:$0xff]
    %v41 = vld [vmem:[%s1 + $0x18] sm:$0xff]
    %v42 = vld [vmem:[%s1 + $0x20] sm:$0xff]
    %v43 = vld [vmem:[%s1 + $0x28] sm:$0xff]
    %vm44 = vcmask 392192
    %v46 = vsel %vm44, %v37, 0
    %48 = vmatprep.subr.mxu0 0.0
    %49 = vmatpush1.msra.mxu0 %v38
    %50 = vmatprep.subr.mxu0 0.0
    %51 = vmatpush1.msra.mxu0 %v39
    %52 = vmatprep.subr.mxu0 0.0
    %53 = vmatpush1.msra.mxu0 %v40
    %54 = vmatprep.subr.mxu0 0.0
    %55 = vmatpush1.msra.mxu0 %v41
    %56 = vmatprep.subr.mxu0 0.0
    %57 = vmatpush1.msra.mxu0 %v42
    %58 = vmatprep.subr.mxu0 0.0
    %59 = vmatpush1.msra.mxu0 %v43
    %60 = vmatprep.subr.mxu0 0.0
    %61 = vmatpush1.msra.mxu0 0.0
    %62 = vmatprep.subr.mxu0 0.0
    %63 = vmatpush1.msra.mxu0 0.0
    %64 = vmatprep.subr.mxu0 0.0
    %65 = vmatpush1.msra.mxu0 0.0
    %66 = vmatprep.subr.mxu0 0.0
    %67 = vmatpush1.msra.mxu0 0.0
    %68 = vmatprep.subr.mxu0 0.0
    %69 = vmatpush1.msra.mxu0 0.0
    %70 = vmatprep.subr.mxu0 0.0
    %71 = vmatpush1.msra.mxu0 0.0
    %72 = vmatprep.subr.mxu0 0.0
    %73 = vmatpush1.msra.mxu0 0.0
    %74 = vmatprep.subr.mxu0 0.0
    %75 = vmatpush1.msra.mxu0 0.0
    %76 = vmatprep.subr.mxu0 0.0
    %77 = vmatpush1.msra.mxu0 0.0
    %78 = vmatprep.subr.mxu0 0.0
    %79 = vmatpush1.msra.mxu0 0.0
    %80 = vmatprep.subr.mxu0 0.0
    %81 = vmatpush1.msra.mxu0 0.0
    %82 = vmatprep.subr.mxu0 0.0
    %83 = vmatpush1.msra.mxu0 0.0
    %84 = vmatprep.subr.mxu0 0.0
    %85 = vmatpush1.msra.mxu0 0.0
    %86 = vmatprep.subr.mxu0 0.0
    %87 = vmatpush1.msra.mxu0 0.0
    %88 = vmatprep.subr.mxu0 0.0
    %89 = vmatpush1.msra.mxu0 0.0
    %90 = vmatprep.subr.mxu0 0.0
    %91 = vmatpush1.msra.mxu0 0.0
    %92 = vmatprep.subr.mxu0 0.0
    %93 = vmatpush1.msra.mxu0 0.0
    %94 = vmatprep.subr.mxu0 0.0
    %95 = vmatpush1.msra.mxu0 0.0
    %96 = vmatprep.subr.mxu0 0.0
    %97 = vmatpush1.msra.mxu0 0.0
    %98 = vmatprep.subr.mxu0 0.0
    %99 = vmatpush1.msra.mxu0 0.0
    %100 = vmatprep.subr.mxu0 0.0
    %101 = vmatpush1.msra.mxu0 0.0
    %102 = vmatprep.subr.mxu0 0.0
    %103 = vmatpush1.msra.mxu0 0.0
    %104 = vmatprep.subr.mxu0 0.0
    %105 = vmatpush1.msra.mxu0 0.0
    %106 = vmatprep.subr.mxu0 0.0
    %107 = vmatpush1.msra.mxu0 0.0
    %108 = vmatprep.subr.mxu0 0.0
    %109 = vmatpush1.msra.mxu0 0.0
    %110 = vmatprep.subr.mxu0 0.0
    %111 = vmatpush1.msra.mxu0 0.0
    %112 = vmatprep.mubr.f32.mxu0 0.0
    %113 = vmatmul.mubr.f32.gmra.mrb[0].mxu0 %v46
    %v114 = vpop.f32.mrb[0].mxu0
    %v115 = vadd.f32 0.0, %v114
    %v116 = vpop.f32.mrb[0].mxu0
    %117 = vdwg.mxu0
    %vm118 = vcmask 261120
    %119 = vst.msk [vmem:[#allocation2] sm:$0xff] %vm118, %v115
    // Predicated region
    $region10: #{tpu_custom_call.1} parent=1 // pred_check
      _
    $region11: #{tpu_custom_call.1} parent=1 // pred_check_branch
      %121 = sbr.rel (0) target = $region13
    $region12: #{tpu_custom_call.1} parent=1 // pred_region
      %s123 = ssub.s32 128, 128
      %124 = vsyncadd [#allocation3], %s123
      %s126 = sshll.u32 [#allocation2], 4
      %s127 = int_to_ptr.vmem [resolvable:$true] %s126
      %129 = dma.vmem_to_hbm [thread:$0]  %s127, 128, %s2, [#allocation3]
    $region13: #{tpu_custom_call.1} parent=1 // pred_fallthru
      _
    // Predicated region
    $region14: #{tpu_custom_call.1} parent=1 // pred_check
      _
    $region15: #{tpu_custom_call.1} parent=1 // pred_check_branch
      %131 = sbr.rel (0) target = $region17
    $region16: #{tpu_custom_call.1} parent=1 // pred_region
      %132 = dma.done [#allocation3], 128
    $region17: #{tpu_custom_call.1} parent=1 // pred_fallthru
      _
    %133 = vsyncpa [#allocation3], 1

</llo_original>
